<compile_context>
chip_gen: v7x
topology: tpu7x:2x2x1
jax: 0.10.0
libtpu: 0.0.40
codegen_flags: <defaults>
</compile_context>

<pallas_src>
import jax
import jax.numpy as jnp
from jax.experimental import pallas as pl
from jax.experimental.pallas import tpu as pltpu


def _round_up(x, m):
    return ((x + m - 1) // m) * m


def _cdiv(a, b):
    return -(-a // b)


def _mlp_kernel(x_ref,
                w1_ref, b1_ref,
                w2_ref, b2_ref,
                w3_ref, b3_ref,
                w4_ref, b4_ref,
                w5_ref, b5_ref,
                o_ref):
    """Fused 5-layer MLP on one batch tile.

    Matmul operands in the weights' dtype (bf16 by default), f32 accumulation on the
    MXU, bias-add / ReLU in f32 on the VPU.
    """
    compute_dtype = w1_ref.dtype

    def dense(h, w_ref, b_ref):
        return (jnp.dot(h, w_ref[...], preferred_element_type=jnp.float32)
                + b_ref[...].astype(jnp.float32))

    # x is read raw (f32, unpadded lanes) from HBM; cast once in VMEM.
    h = x_ref[...].astype(compute_dtype)
    for w_ref, b_ref in ((w1_ref, b1_ref), (w2_ref, b2_ref),
                         (w3_ref, b3_ref), (w4_ref, b4_ref)):
        # ReLU in f32, downcast only the next matmul operand.
        h = jnp.maximum(dense(h, w_ref, b_ref), 0.0).astype(compute_dtype)
    o_ref[...] = dense(h, w5_ref, b5_ref).astype(o_ref.dtype)


def demonstrator_mlp(x, params, *, block_batch=512, compute_dtype=jnp.bfloat16):
    """Run the fused MLP Pallas kernel.

    x:       (B, input_dim) float32
    params:  dict with w1..w5 of shape (in, out) = W.T of nn.Linear and
             b1..b5 of shape (1, out)
    compute_dtype: matmul-operand dtype (bf16 by default; jnp.float32 for exact
                   PyTorch-parity math)
    """
    B, input_dim = x.shape
    hidden_dim = params["w1"].shape[1]
    output_dim = params["w5"].shape[1]
    out_dtype = x.dtype

    LANE = 128
    sub = 16 if compute_dtype == jnp.bfloat16 else 8
    hid_p = _round_up(hidden_dim, LANE)

    def pad2(a, rows, cols, dt):
        return jnp.pad(a, ((0, rows - a.shape[0]), (0, cols - a.shape[1]))).astype(dt)

    # Only the internal hidden dim is padded to 128 lanes (zero pad => exact math);
    # the x-facing (input_dim) and output-facing (output_dim) dims stay raw.
    w_dims = [(input_dim, hid_p), (hid_p, hid_p), (hid_p, hid_p),
              (hid_p, hid_p), (hid_p, output_dim)]
    ws, bs = [], []
    for idx, (r, c) in enumerate(w_dims, start=1):
        ws.append(pad2(params[f"w{idx}"], r, c, compute_dtype))
        bs.append(pad2(params[f"b{idx}"], 1, c, jnp.float32))

    # Batch tile: big enough to amortize the ~0.35 us/step overhead and fill the MXU
    # M dimension, but capped at ceil(B/2) so the parallel batch axis has >= 2 grid
    # steps whenever the batch allows (v7x has 2 TensorCores).
    tm = _round_up(min(block_batch, _round_up(B, sub)), sub)
    if B >= 2 * sub:
        tm = min(tm, _round_up(_cdiv(B, 2), sub))
    n_steps = _cdiv(B, tm)
    B_pad = n_steps * tm
    grid = (n_steps,)

    # Row-only pad of x (no lane pad, no cast) — a no-op at aligned large batch.
    x_in = x if B_pad == B else jnp.pad(x, ((0, B_pad - B), (0, 0)))

    # --- specs ----------------------------------------------------------------
    in_specs = [pl.BlockSpec((tm, input_dim), lambda i: (i, 0))]
    for w, b in zip(ws, bs):
        # Grid-invariant blocks (constant index_map): weights stay VMEM-resident.
        in_specs.append(pl.BlockSpec(w.shape, lambda i: (0, 0)))
        in_specs.append(pl.BlockSpec(b.shape, lambda i: (0, 0)))
    out_spec = pl.BlockSpec((tm, output_dim), lambda i: (i, 0))

    # Advisory cost model for XLA scheduling around the call.
    flops = 2 * B_pad * (input_dim * hid_p + 3 * hid_p * hid_p + hid_p * output_dim)
    param_bytes = sum(int(a.size) * a.dtype.itemsize for a in ws + bs)
    bytes_accessed = (B_pad * input_dim * x.dtype.itemsize
                      + B_pad * output_dim * jnp.dtype(out_dtype).itemsize
                      + param_bytes)

    out = pl.pallas_call(
        _mlp_kernel,
        out_shape=jax.ShapeDtypeStruct((B_pad, output_dim), out_dtype),
        grid_spec=pltpu.PrefetchScalarGridSpec(
            num_scalar_prefetch=0,
            grid=grid,
            in_specs=in_specs,
            out_specs=out_spec,
        ),
        compiler_params=pltpu.CompilerParams(
            dimension_semantics=("parallel",),
        ),
        cost_estimate=pl.CostEstimate(
            flops=flops, transcendentals=0, bytes_accessed=bytes_accessed),
    )(x_in,
      ws[0], bs[0], ws[1], bs[1], ws[2], bs[2], ws[3], bs[3], ws[4], bs[4])

    # Slice exists only when the batch was row-padded (never at aligned large B).
    return out if B_pad == B else out[:B]


def init_params(key, input_dim, hidden_dim, output_dim):
    """Deterministic PyTorch-style (uniform +/- 1/sqrt(fan_in)) init.

    Weights stored as (in_features, out_features) = W.T of nn.Linear.
    Biases stored as (1, out_features) for clean 2D broadcasting on TPU.
    """
    dims = [(input_dim, hidden_dim),
            (hidden_dim, hidden_dim),
            (hidden_dim, hidden_dim),
            (hidden_dim, hidden_dim),
            (hidden_dim, output_dim)]
    params = {}
    for idx, (fan_in, fan_out) in enumerate(dims, start=1):
        key, kw, kb = jax.random.split(key, 3)
        bound = 1.0 / jnp.sqrt(jnp.float32(fan_in))
        params[f"w{idx}"] = jax.random.uniform(
            kw, (fan_in, fan_out), jnp.float32, minval=-bound, maxval=bound)
        params[f"b{idx}"] = jax.random.uniform(
            kb, (1, fan_out), jnp.float32, minval=-bound, maxval=bound)
    return params


def reference_mlp(x, params, compute_dtype=jnp.bfloat16):
    """Pure-JAX reference matching the kernel's precision policy
    (operands in compute_dtype, f32 accumulation, f32 bias-add/ReLU)."""
    def dense(h, w, b):
        return jnp.dot(h.astype(compute_dtype), w.astype(compute_dtype),
                       preferred_element_type=jnp.float32) + b
    h = jnp.maximum(dense(x, params["w1"], params["b1"]), 0.0)
    h = jnp.maximum(dense(h, params["w2"], params["b2"]), 0.0)
    h = jnp.maximum(dense(h, params["w3"], params["b3"]), 0.0)
    h = jnp.maximum(dense(h, params["w4"], params["b4"]), 0.0)
    return dense(h, params["w5"], params["b5"])


if __name__ == "__main__":
    input_dim, hidden_dim, output_dim = 16, 32, 8
    batch = 8

    key = jax.random.PRNGKey(0)
    key, kx = jax.random.split(key)
    x = jax.random.normal(kx, (batch, input_dim), jnp.float32)
    params = init_params(key, input_dim, hidden_dim, output_dim)

    out = demonstrator_mlp(x, params)
    out = jax.block_until_ready(out)

    ref = reference_mlp(x, params)
    assert out.shape == (batch, output_dim)
    assert jnp.allclose(out, ref, atol=1e-3, rtol=1e-3), "mismatch vs reference"

    print("KERNEL_OK")
</pallas_src>

<mosaic_0001>
module attributes {stable_mosaic.version = 11 : i64} {
  func.func @_mlp_kernel(%arg0: i32, %arg1: memref<16x16xf32, #tpu.memory_space<vmem>>, %arg2: memref<16x128xbf16, #tpu.memory_space<vmem>>, %arg3: memref<1x128xf32, #tpu.memory_space<vmem>>, %arg4: memref<128x128xbf16, #tpu.memory_space<vmem>>, %arg5: memref<1x128xf32, #tpu.memory_space<vmem>>, %arg6: memref<128x128xbf16, #tpu.memory_space<vmem>>, %arg7: memref<1x128xf32, #tpu.memory_space<vmem>>, %arg8: memref<128x128xbf16, #tpu.memory_space<vmem>>, %arg9: memref<1x128xf32, #tpu.memory_space<vmem>>, %arg10: memref<128x8xbf16, #tpu.memory_space<vmem>>, %arg11: memref<1x8xf32, #tpu.memory_space<vmem>>, %arg12: memref<16x8xf32, #tpu.memory_space<vmem>>) attributes {dimension_semantics = [#tpu.dimension_semantics<parallel>], iteration_bounds = array<i64: 1>, scalar_prefetch = 0 : i64, scratch_operands = 0 : i64, tpu.core_type = #tpu.core_type<tc>, window_params = [{transform_indices = @transform_0, window_bounds = array<i64: 16, 16>}, {pipeline_mode = #tpu.pipeline_mode<synchronous>, transform_indices = @transform_1, window_bounds = array<i64: 16, 128>}, {pipeline_mode = #tpu.pipeline_mode<synchronous>, transform_indices = @transform_2, window_bounds = array<i64: 1, 128>}, {pipeline_mode = #tpu.pipeline_mode<synchronous>, transform_indices = @transform_3, window_bounds = array<i64: 128, 128>}, {pipeline_mode = #tpu.pipeline_mode<synchronous>, transform_indices = @transform_4, window_bounds = array<i64: 1, 128>}, {pipeline_mode = #tpu.pipeline_mode<synchronous>, transform_indices = @transform_5, window_bounds = array<i64: 128, 128>}, {pipeline_mode = #tpu.pipeline_mode<synchronous>, transform_indices = @transform_6, window_bounds = array<i64: 1, 128>}, {pipeline_mode = #tpu.pipeline_mode<synchronous>, transform_indices = @transform_7, window_bounds = array<i64: 128, 128>}, {pipeline_mode = #tpu.pipeline_mode<synchronous>, transform_indices = @transform_8, window_bounds = array<i64: 1, 128>}, {pipeline_mode = #tpu.pipeline_mode<synchronous>, transform_indices = @transform_9, window_bounds = array<i64: 128, 8>}, {pipeline_mode = #tpu.pipeline_mode<synchronous>, transform_indices = @transform_10, window_bounds = array<i64: 1, 8>}, {transform_indices = @transform_11, window_bounds = array<i64: 16, 8>}]} {
    %c0 = arith.constant 0 : index
    %c0_0 = arith.constant 0 : index
    %0 = vector.load %arg1[%c0, %c0_0] : memref<16x16xf32, #tpu.memory_space<vmem>>, vector<16x16xf32>
    %1 = arith.truncf %0 : vector<16x16xf32> to vector<16x16xbf16>
    %c0_1 = arith.constant 0 : index
    %c0_2 = arith.constant 0 : index
    %2 = vector.load %arg2[%c0_1, %c0_2] : memref<16x128xbf16, #tpu.memory_space<vmem>>, vector<16x128xbf16>
    %cst = arith.constant dense<0.000000e+00> : vector<16x128xf32>
    %3 = tpu.matmul %1, %2, %cst {dimension_numbers = #tpu.dot_dimension_numbers<[1], [0], [0], [1], [0, 0, 1, 1], [], []>} : vector<16x16xbf16>, vector<16x128xbf16>, vector<16x128xf32> -> vector<16x128xf32>
    %c0_3 = arith.constant 0 : index
    %c0_4 = arith.constant 0 : index
    %4 = vector.load %arg3[%c0_3, %c0_4] : memref<1x128xf32, #tpu.memory_space<vmem>>, vector<1x128xf32>
    %5 = vector.broadcast %4 : vector<1x128xf32> to vector<16x128xf32>
    %6 = arith.addf %3, %5 : vector<16x128xf32>
    %cst_5 = arith.constant 0.000000e+00 : f32
    %7 = vector.broadcast %cst_5 : f32 to vector<16x128xf32>
    %8 = arith.maximumf %6, %7 : vector<16x128xf32>
    %9 = arith.truncf %8 : vector<16x128xf32> to vector<16x128xbf16>
    %c0_6 = arith.constant 0 : index
    %c0_7 = arith.constant 0 : index
    %10 = vector.load %arg4[%c0_6, %c0_7] : memref<128x128xbf16, #tpu.memory_space<vmem>>, vector<128x128xbf16>
    %cst_8 = arith.constant dense<0.000000e+00> : vector<16x128xf32>
    %11 = tpu.matmul %9, %10, %cst_8 {dimension_numbers = #tpu.dot_dimension_numbers<[1], [0], [0], [1], [0, 0, 1, 1], [], []>} : vector<16x128xbf16>, vector<128x128xbf16>, vector<16x128xf32> -> vector<16x128xf32>
    %c0_9 = arith.constant 0 : index
    %c0_10 = arith.constant 0 : index
    %12 = vector.load %arg5[%c0_9, %c0_10] : memref<1x128xf32, #tpu.memory_space<vmem>>, vector<1x128xf32>
    %13 = vector.broadcast %12 : vector<1x128xf32> to vector<16x128xf32>
    %14 = arith.addf %11, %13 : vector<16x128xf32>
    %cst_11 = arith.constant 0.000000e+00 : f32
    %15 = vector.broadcast %cst_11 : f32 to vector<16x128xf32>
    %16 = arith.maximumf %14, %15 : vector<16x128xf32>
    %17 = arith.truncf %16 : vector<16x128xf32> to vector<16x128xbf16>
    %c0_12 = arith.constant 0 : index
    %c0_13 = arith.constant 0 : index
    %18 = vector.load %arg6[%c0_12, %c0_13] : memref<128x128xbf16, #tpu.memory_space<vmem>>, vector<128x128xbf16>
    %cst_14 = arith.constant dense<0.000000e+00> : vector<16x128xf32>
    %19 = tpu.matmul %17, %18, %cst_14 {dimension_numbers = #tpu.dot_dimension_numbers<[1], [0], [0], [1], [0, 0, 1, 1], [], []>} : vector<16x128xbf16>, vector<128x128xbf16>, vector<16x128xf32> -> vector<16x128xf32>
    %c0_15 = arith.constant 0 : index
    %c0_16 = arith.constant 0 : index
    %20 = vector.load %arg7[%c0_15, %c0_16] : memref<1x128xf32, #tpu.memory_space<vmem>>, vector<1x128xf32>
    %21 = vector.broadcast %20 : vector<1x128xf32> to vector<16x128xf32>
    %22 = arith.addf %19, %21 : vector<16x128xf32>
    %cst_17 = arith.constant 0.000000e+00 : f32
    %23 = vector.broadcast %cst_17 : f32 to vector<16x128xf32>
    %24 = arith.maximumf %22, %23 : vector<16x128xf32>
    %25 = arith.truncf %24 : vector<16x128xf32> to vector<16x128xbf16>
    %c0_18 = arith.constant 0 : index
    %c0_19 = arith.constant 0 : index
    %26 = vector.load %arg8[%c0_18, %c0_19] : memref<128x128xbf16, #tpu.memory_space<vmem>>, vector<128x128xbf16>
    %cst_20 = arith.constant dense<0.000000e+00> : vector<16x128xf32>
    %27 = tpu.matmul %25, %26, %cst_20 {dimension_numbers = #tpu.dot_dimension_numbers<[1], [0], [0], [1], [0, 0, 1, 1], [], []>} : vector<16x128xbf16>, vector<128x128xbf16>, vector<16x128xf32> -> vector<16x128xf32>
    %c0_21 = arith.constant 0 : index
    %c0_22 = arith.constant 0 : index
    %28 = vector.load %arg9[%c0_21, %c0_22] : memref<1x128xf32, #tpu.memory_space<vmem>>, vector<1x128xf32>
    %29 = vector.broadcast %28 : vector<1x128xf32> to vector<16x128xf32>
    %30 = arith.addf %27, %29 : vector<16x128xf32>
    %cst_23 = arith.constant 0.000000e+00 : f32
    %31 = vector.broadcast %cst_23 : f32 to vector<16x128xf32>
    %32 = arith.maximumf %30, %31 : vector<16x128xf32>
    %33 = arith.truncf %32 : vector<16x128xf32> to vector<16x128xbf16>
    %c0_24 = arith.constant 0 : index
    %c0_25 = arith.constant 0 : index
    %34 = vector.load %arg10[%c0_24, %c0_25] : memref<128x8xbf16, #tpu.memory_space<vmem>>, vector<128x8xbf16>
    %cst_26 = arith.constant dense<0.000000e+00> : vector<16x8xf32>
    %35 = tpu.matmul %33, %34, %cst_26 {dimension_numbers = #tpu.dot_dimension_numbers<[1], [0], [0], [1], [0, 0, 1, 1], [], []>} : vector<16x128xbf16>, vector<128x8xbf16>, vector<16x8xf32> -> vector<16x8xf32>
    %c0_27 = arith.constant 0 : index
    %c0_28 = arith.constant 0 : index
    %36 = vector.load %arg11[%c0_27, %c0_28] : memref<1x8xf32, #tpu.memory_space<vmem>>, vector<1x8xf32>
    %37 = vector.broadcast %36 : vector<1x8xf32> to vector<16x8xf32>
    %38 = arith.addf %35, %37 : vector<16x8xf32>
    %c0_29 = arith.constant 0 : index
    %c0_30 = arith.constant 0 : index
    %39 = vector.load %arg12[%c0_29, %c0_30] : memref<16x8xf32, #tpu.memory_space<vmem>>, vector<16x8xf32>
    tpu.vector_store %arg12[%c0_29, %c0_30], %38 {strides = array<i32>} : memref<16x8xf32, #tpu.memory_space<vmem>>, vector<16x8xf32>,
    return
  }
  func.func @transform_0(%arg0: i32) -> (i32, i32) {
    %c0_i32 = arith.constant 0 : i32
    %c0_i32_0 = arith.constant 0 : i32
    return %arg0, %c0_i32 : i32, i32
  }
  func.func @transform_1(%arg0: i32) -> (i32, i32) {
    %c0_i32 = arith.constant 0 : i32
    %c0_i32_0 = arith.constant 0 : i32
    %c0_i32_1 = arith.constant 0 : i32
    return %c0_i32, %c0_i32_0 : i32, i32
  }
  func.func @transform_2(%arg0: i32) -> (i32, i32) {
    %c0_i32 = arith.constant 0 : i32
    %c0_i32_0 = arith.constant 0 : i32
    %c0_i32_1 = arith.constant 0 : i32
    return %c0_i32, %c0_i32_0 : i32, i32
  }
  func.func @transform_3(%arg0: i32) -> (i32, i32) {
    %c0_i32 = arith.constant 0 : i32
    %c0_i32_0 = arith.constant 0 : i32
    %c0_i32_1 = arith.constant 0 : i32
    return %c0_i32, %c0_i32_0 : i32, i32
  }
  func.func @transform_4(%arg0: i32) -> (i32, i32) {
    %c0_i32 = arith.constant 0 : i32
    %c0_i32_0 = arith.constant 0 : i32
    %c0_i32_1 = arith.constant 0 : i32
    return %c0_i32, %c0_i32_0 : i32, i32
  }
  func.func @transform_5(%arg0: i32) -> (i32, i32) {
    %c0_i32 = arith.constant 0 : i32
    %c0_i32_0 = arith.constant 0 : i32
    %c0_i32_1 = arith.constant 0 : i32
    return %c0_i32, %c0_i32_0 : i32, i32
  }
  func.func @transform_6(%arg0: i32) -> (i32, i32) {
    %c0_i32 = arith.constant 0 : i32
    %c0_i32_0 = arith.constant 0 : i32
    %c0_i32_1 = arith.constant 0 : i32
    return %c0_i32, %c0_i32_0 : i32, i32
  }
  func.func @transform_7(%arg0: i32) -> (i32, i32) {
    %c0_i32 = arith.constant 0 : i32
    %c0_i32_0 = arith.constant 0 : i32
    %c0_i32_1 = arith.constant 0 : i32
    return %c0_i32, %c0_i32_0 : i32, i32
  }
  func.func @transform_8(%arg0: i32) -> (i32, i32) {
    %c0_i32 = arith.constant 0 : i32
    %c0_i32_0 = arith.constant 0 : i32
    %c0_i32_1 = arith.constant 0 : i32
    return %c0_i32, %c0_i32_0 : i32, i32
  }
  func.func @transform_9(%arg0: i32) -> (i32, i32) {
    %c0_i32 = arith.constant 0 : i32
    %c0_i32_0 = arith.constant 0 : i32
    %c0_i32_1 = arith.constant 0 : i32
    return %c0_i32, %c0_i32_0 : i32, i32
  }
  func.func @transform_10(%arg0: i32) -> (i32, i32) {
    %c0_i32 = arith.constant 0 : i32
    %c0_i32_0 = arith.constant 0 : i32
    %c0_i32_1 = arith.constant 0 : i32
    return %c0_i32, %c0_i32_0 : i32, i32
  }
  func.func @transform_11(%arg0: i32) -> (i32, i32) {
    %c0_i32 = arith.constant 0 : i32
    %c0_i32_0 = arith.constant 0 : i32
    return %arg0, %c0_i32 : i32, i32
  }
}

</mosaic_0001>

<llo_original>
// kernel: tpu_custom_call.1
$region0: #{tpu_custom_call.1}
  #allocation0 [shape = 'u32[]', space=smem, size = 0x4, offset = 0x4, fixed_abs, tag = 'smem constant byte address 0x4 - core index']
  #allocation1 [shape = 'u32[144,128]{1,0:T(1,128)}', space=vmem, size = 0x12000, scoped, tag = 'internal scratch']
  %s0 = inlined_call_operand.hbm [shape: f32[16,16], index: 0, kind: input, shape index: {}]
  %s1 = inlined_call_operand.vmem [shape: bf16[16,128], index: 1, kind: input, shape index: {}]
  %s2 = inlined_call_operand.vmem [shape: f32[1,128], index: 2, kind: input, shape index: {}]
  %s3 = inlined_call_operand.vmem [shape: bf16[128,128], index: 3, kind: input, shape index: {}]
  %s4 = inlined_call_operand.vmem [shape: f32[1,128], index: 4, kind: input, shape index: {}]
  %s5 = inlined_call_operand.hbm [shape: bf16[128,128], index: 5, kind: input, shape index: {}]
  %s6 = inlined_call_operand.vmem [shape: f32[1,128], index: 6, kind: input, shape index: {}]
  %s7 = inlined_call_operand.hbm [shape: bf16[128,128], index: 7, kind: input, shape index: {}]
  %s8 = inlined_call_operand.vmem [shape: f32[1,128], index: 8, kind: input, shape index: {}]
  %s9 = inlined_call_operand.vmem [shape: bf16[128,8], index: 9, kind: input, shape index: {}]
  %s10 = inlined_call_operand.vmem [shape: f32[1,8], index: 10, kind: input, shape index: {}]
  %s11 = inlined_call_operand.vmem [shape: f32[16,8], index: 11, kind: output, shape index: {}]
  %s12 = sld [smem:[#allocation0]]
  $region66: #{tpu_custom_call.1} parent=0
    _
  %s14 = ssub.s32 1, %s12
  %s15 = scalar_select 0, %s14, %s12
  $region1: #{tpu_custom_call.1} parent=0
    #allocation2 [shape = 'u8[8192]{0}', space=vmem, size = 0x2000, scoped, tag = 'input window, operand 0, single buffered']
    #allocation3 [shape = 's32[1]{0}', space=sflag, size = 0x4, scoped, tag = 'scoped memory for tpu_custom_call.1']
    #allocation4 [shape = 'u8[32768]{0}', space=vmem, size = 0x8000, scoped, tag = 'input window, operand 5, single buffered']
    #allocation5 [shape = 's32[1]{0}', space=sflag, size = 0x4, scoped, tag = 'scoped memory for tpu_custom_call.1']
    #allocation6 [shape = 'u8[32768]{0}', space=vmem, size = 0x8000, scoped, tag = 'input window, operand 7, single buffered']
    %16 = vsyncpa [#allocation3], 0
    %17 = vsyncpa [#allocation5], 0
    // Predicated region
    $region2: #{tpu_custom_call.1} parent=1 // pred_check
      _
    $region3: #{tpu_custom_call.1} parent=1 // pred_check_branch
      %19 = sbr.rel (0) target = $region5
    $region4: #{tpu_custom_call.1} parent=1 // pred_region
      %s21 = ssub.s32 256, 256
      %22 = vsyncadd [#allocation3], %s21
      %s23 = sshll.u32 [#allocation2], 4
      %s24 = int_to_ptr.vmem [resolvable:$true] %s23
      %29 = dma.hbm_to_vmem [thread:$0]  %s0, 256, %s24, [#allocation3], 128, 128, 8
    $region5: #{tpu_custom_call.1} parent=1 // pred_fallthru
      _
    // Predicated region
    $region6: #{tpu_custom_call.1} parent=1 // pred_check
      _
    $region7: #{tpu_custom_call.1} parent=1 // pred_check_branch
      %31 = sbr.rel (0) target = $region9
    $region8: #{tpu_custom_call.1} parent=1 // pred_region
      _
    $region9: #{tpu_custom_call.1} parent=1 // pred_fallthru
      _
    // Predicated region
    $region10: #{tpu_custom_call.1} parent=1 // pred_check
      _
    $region11: #{tpu_custom_call.1} parent=1 // pred_check_branch
      %33 = sbr.rel (0) target = $region13
    $region12: #{tpu_custom_call.1} parent=1 // pred_region
      _
    $region13: #{tpu_custom_call.1} parent=1 // pred_fallthru
      _
    // Predicated region
    $region14: #{tpu_custom_call.1} parent=1 // pred_check
      _
    $region15: #{tpu_custom_call.1} parent=1 // pred_check_branch
      %35 = sbr.rel (0) target = $region17
    $region16: #{tpu_custom_call.1} parent=1 // pred_region
      _
    $region17: #{tpu_custom_call.1} parent=1 // pred_fallthru
      _
    // Predicated region
    $region18: #{tpu_custom_call.1} parent=1 // pred_check
      _
    $region19: #{tpu_custom_call.1} parent=1 // pred_check_branch
      %37 = sbr.rel (0) target = $region21
    $region20: #{tpu_custom_call.1} parent=1 // pred_region
      _
    $region21: #{tpu_custom_call.1} parent=1 // pred_fallthru
      _
    // Predicated region
    $region22: #{tpu_custom_call.1} parent=1 // pred_check
      _
    $region23: #{tpu_custom_call.1} parent=1 // pred_check_branch
      %39 = sbr.rel (0) target = $region25
    $region24: #{tpu_custom_call.1} parent=1 // pred_region
      %s41 = ssub.s32 1024, 1024
      %42 = vsyncadd [#allocation5], %s41
      %s43 = sshll.u32 [#allocation4], 4
      %s44 = int_to_ptr.vmem [resolvable:$true] %s43
      %49 = dma.hbm_to_vmem [thread:$0]  %s5, 1024, %s44, [#allocation5], 64, 64, 4
    $region25: #{tpu_custom_call.1} parent=1 // pred_fallthru
      _
    // Predicated region
    $region26: #{tpu_custom_call.1} parent=1 // pred_check
      _
    $region27: #{tpu_custom_call.1} parent=1 // pred_check_branch
      %51 = sbr.rel (0) target = $region29
    $region28: #{tpu_custom_call.1} parent=1 // pred_region
      _
    $region29: #{tpu_custom_call.1} parent=1 // pred_fallthru
      _
    // Predicated region
    $region30: #{tpu_custom_call.1} parent=1 // pred_check
      _
    $region31: #{tpu_custom_call.1} parent=1 // pred_check_branch
      %53 = sbr.rel (0) target = $region33
    $region32: #{tpu_custom_call.1} parent=1 // pred_region
      %s55 = ssub.s32 1024, 1024
      %56 = vsyncadd [#allocation5], %s55
      %s57 = sshll.u32 [#allocation6], 4
      %s58 = int_to_ptr.vmem [resolvable:$true] %s57
      %63 = dma.hbm_to_vmem [thread:$0]  %s7, 1024, %s58, [#allocation5], 64, 64, 4
    $region33: #{tpu_custom_call.1} parent=1 // pred_fallthru
      _
    // Predicated region
    $region34: #{tpu_custom_call.1} parent=1 // pred_check
      _
    $region35: #{tpu_custom_call.1} parent=1 // pred_check_branch
      %65 = sbr.rel (0) target = $region37
    $region36: #{tpu_custom_call.1} parent=1 // pred_region
      _
    $region37: #{tpu_custom_call.1} parent=1 // pred_fallthru
      _
    // Predicated region
    $region38: #{tpu_custom_call.1} parent=1 // pred_check
      _
    $region39: #{tpu_custom_call.1} parent=1 // pred_check_branch
      %67 = sbr.rel (0) target = $region41
    $region40: #{tpu_custom_call.1} parent=1 // pred_region
      _
    $region41: #{tpu_custom_call.1} parent=1 // pred_fallthru
      _
    // Predicated region
    $region42: #{tpu_custom_call.1} parent=1 // pred_check
      _
    $region43: #{tpu_custom_call.1} parent=1 // pred_check_branch
      %69 = sbr.rel (0) target = $region45
    $region44: #{tpu_custom_call.1} parent=1 // pred_region
      _
    $region45: #{tpu_custom_call.1} parent=1 // pred_fallthru
      _
    // Predicated region
    $region46: #{tpu_custom_call.1} parent=1 // pred_check
      _
    $region47: #{tpu_custom_call.1} parent=1 // pred_check_branch
      %71 = sbr.rel (0) target = $region49
    $region48: #{tpu_custom_call.1} parent=1 // pred_region
      %72 = dma.done [#allocation3], 256
    $region49: #{tpu_custom_call.1} parent=1 // pred_fallthru
      _
    // Predicated region
    $region50: #{tpu_custom_call.1} parent=1 // pred_check
      _
    $region51: #{tpu_custom_call.1} parent=1 // pred_check_branch
      %74 = sbr.rel (0) target = $region53
    $region52: #{tpu_custom_call.1} parent=1 // pred_region
      %75 = dma.done [#allocation5], 1024
    $region53: #{tpu_custom_call.1} parent=1 // pred_fallthru
      _
    // Predicated region
    $region54: #{tpu_custom_call.1} parent=1 // pred_check
      _
    $region55: #{tpu_custom_call.1} parent=1 // pred_check_branch
      %77 = sbr.rel (0) target = $region57
    $region56: #{tpu_custom_call.1} parent=1 // pred_region
      %78 = dma.done [#allocation5], 1024
    $region57: #{tpu_custom_call.1} parent=1 // pred_fallthru
      _
    %v80 = vld [vmem:[#allocation2] sm:$0xff]
    %v81 = vld [vmem:[#allocation2 + $0x8] sm:$0xff]
    %v82 = vpack.c.bf16 %v81, %v80
    %v83 = vld [vmem:[%s1] sm:$0xf]
    %v84 = vld [vmem:[%s1 + $0x4] sm:$0xf]
    %v85 = vld [vmem:[%s2] sm:$0x1]
    %v87 = vlaneseq
    %v88 = vshrl.u32 %v87, 7
    %v89 = vsub.s32 0, %v88
    %v90 = vrot.slane %v85, %v89
    %v94 = vunpack.c.l.b16 %v83
    %v95 = vunpack.c.l.b16 %v84
    %v96 = vpack.c.b16 %v95, %v94
    %vm98 = vcmask 130048
    %v100 = vsel %vm98, %v82, 0
    %102 = vmatprep.subr.bf16.mxu0 0
    %103 = vmatpush1.bf16.msra.mxu0 %v96
    %104 = vmatprep.subr.bf16.mxu0 0
    %105 = vmatpush1.bf16.msra.mxu0 0
    %106 = vmatprep.subr.bf16.mxu0 0
    %107 = vmatpush1.bf16.msra.mxu0 0
    %108 = vmatprep.subr.bf16.mxu0 0
    %109 = vmatpush1.bf16.msra.mxu0 0
    %110 = vmatprep.subr.bf16.mxu0 0
    %111 = vmatpush1.bf16.msra.mxu0 0
    %112 = vmatprep.subr.bf16.mxu0 0
    %113 = vmatpush1.bf16.msra.mxu0 0
    %114 = vmatprep.subr.bf16.mxu0 0
    %115 = vmatpush1.bf16.msra.mxu0 0
    %116 = vmatprep.subr.bf16.mxu0 0
    %117 = vmatpush1.bf16.msra.mxu0 0
    %118 = vmatprep.subr.bf16.mxu0 0
    %119 = vmatpush1.bf16.msra.mxu0 0
    %120 = vmatprep.subr.bf16.mxu0 0
    %121 = vmatpush1.bf16.msra.mxu0 0
    %122 = vmatprep.subr.bf16.mxu0 0
    %123 = vmatpush1.bf16.msra.mxu0 0
    %124 = vmatprep.subr.bf16.mxu0 0
    %125 = vmatpush1.bf16.msra.mxu0 0
    %126 = vmatprep.subr.bf16.mxu0 0
    %127 = vmatpush1.bf16.msra.mxu0 0
    %128 = vmatprep.subr.bf16.mxu0 0
    %129 = vmatpush1.bf16.msra.mxu0 0
    %130 = vmatprep.subr.bf16.mxu0 0
    %131 = vmatpush1.bf16.msra.mxu0 0
    %132 = vmatprep.subr.bf16.mxu0 0
    %133 = vmatpush1.bf16.msra.mxu0 0
    %134 = vmatprep.mubr.bf16.mxu0 0
    %135 = vmatmul.mubr.bf16.gmra.mrb[0].mxu0 %v100
    %v136 = vpop.f32.mrb[0].mxu0
    %v137 = vadd.f32 %v90, %v136
    %v138 = vpop.f32.mrb[0].mxu0
    %v139 = vpop.f32.mrb[0].mxu0
    %v140 = vadd.f32 %v90, %v139
    %v141 = vpop.f32.mrb[0].mxu0
    %142 = vdwg.mxu0
    %v143 = vmax.f32 %v137, 0.0
    %v144 = vmax.f32 %v140, 0.0
    %v145 = vpack.c.bf16 %v144, %v143
    %v146 = vld [vmem:[%s3] sm:$0xf]
    %v147 = vld [vmem:[%s3 + $0x4] sm:$0xf]
    %v148 = vld [vmem:[%s3 + $0x8] sm:$0xf]
    %v149 = vld [vmem:[%s3 + $0xc] sm:$0xf]
    %v150 = vld [vmem:[%s3 + $0x10] sm:$0xf]
    %v151 = vld [vmem:[%s3 + $0x14] sm:$0xf]
    %v152 = vld [vmem:[%s3 + $0x18] sm:$0xf]
    %v153 = vld [vmem:[%s3 + $0x1c] sm:$0xf]
    %v154 = vld [vmem:[%s3 + $0x20] sm:$0xf]
    %v155 = vld [vmem:[%s3 + $0x24] sm:$0xf]
    %v156 = vld [vmem:[%s3 + $0x28] sm:$0xf]
    %v157 = vld [vmem:[%s3 + $0x2c] sm:$0xf]
    %v158 = vld [vmem:[%s3 + $0x30] sm:$0xf]
    %v159 = vld [vmem:[%s3 + $0x34] sm:$0xf]
    %v160 = vld [vmem:[%s3 + $0x38] sm:$0xf]
    %v161 = vld [vmem:[%s3 + $0x3c] sm:$0xf]
    %v162 = vld [vmem:[%s4] sm:$0x1]
    %v164 = vlaneseq
    %v165 = vshrl.u32 %v164, 7
    %v166 = vsub.s32 0, %v165
    %v167 = vrot.slane %v162, %v166
    %v185 = vunpack.c.l.b16 %v146
    %v186 = vunpack.c.l.b16 %v147
    %v187 = vunpack.c.l.b16 %v148
    %v188 = vunpack.c.l.b16 %v149
    %v189 = vunpack.c.l.b16 %v150
    %v190 = vunpack.c.l.b16 %v151
    %v191 = vunpack.c.l.b16 %v152
    %v192 = vunpack.c.l.b16 %v153
    %v193 = vunpack.c.l.b16 %v154
    %v194 = vunpack.c.l.b16 %v155
    %v195 = vunpack.c.l.b16 %v156
    %v196 = vunpack.c.l.b16 %v157
    %v197 = vunpack.c.l.b16 %v158
    %v198 = vunpack.c.l.b16 %v159
    %v199 = vunpack.c.l.b16 %v160
    %v200 = vunpack.c.l.b16 %v161
    %v201 = vpack.c.b16 %v186, %v185
    %v202 = vpack.c.b16 %v188, %v187
    %v203 = vpack.c.b16 %v190, %v189
    %v204 = vpack.c.b16 %v192, %v191
    %v205 = vpack.c.b16 %v194, %v193
    %v206 = vpack.c.b16 %v196, %v195
    %v207 = vpack.c.b16 %v198, %v197
    %v208 = vpack.c.b16 %v200, %v199
    %217 = vmatprep.subr.bf16.mxu0 0
    %218 = vmatpush1.bf16.msra.mxu0 %v201
    %219 = vmatprep.subr.bf16.mxu0 0
    %220 = vmatpush1.bf16.msra.mxu0 %v202
    %221 = vmatprep.subr.bf16.mxu0 0
    %222 = vmatpush1.bf16.msra.mxu0 %v203
    %223 = vmatprep.subr.bf16.mxu0 0
    %224 = vmatpush1.bf16.msra.mxu0 %v204
    %225 = vmatprep.subr.bf16.mxu0 0
    %226 = vmatpush1.bf16.msra.mxu0 %v205
    %227 = vmatprep.subr.bf16.mxu0 0
    %228 = vmatpush1.bf16.msra.mxu0 %v206
    %229 = vmatprep.subr.bf16.mxu0 0
    %230 = vmatpush1.bf16.msra.mxu0 %v207
    %231 = vmatprep.subr.bf16.mxu0 0
    %232 = vmatpush1.bf16.msra.mxu0 %v208
    %233 = vmatprep.subr.bf16.mxu0 0
    %234 = vmatpush1.bf16.msra.mxu0 0
    %235 = vmatprep.subr.bf16.mxu0 0
    %236 = vmatpush1.bf16.msra.mxu0 0
    %237 = vmatprep.subr.bf16.mxu0 0
    %238 = vmatpush1.bf16.msra.mxu0 0
    %239 = vmatprep.subr.bf16.mxu0 0
    %240 = vmatpush1.bf16.msra.mxu0 0
    %241 = vmatprep.subr.bf16.mxu0 0
    %242 = vmatpush1.bf16.msra.mxu0 0
    %243 = vmatprep.subr.bf16.mxu0 0
    %244 = vmatpush1.bf16.msra.mxu0 0
    %245 = vmatprep.subr.bf16.mxu0 0
    %246 = vmatpush1.bf16.msra.mxu0 0
    %247 = vmatprep.subr.bf16.mxu0 0
    %248 = vmatpush1.bf16.msra.mxu0 0
    %249 = vmatprep.mubr.bf16.mxu0 0
    %250 = vmatmul.mubr.bf16.gmra.mrb[0].mxu0 %v145
    %v251 = vpop.f32.mrb[0].mxu0
    %v252 = vadd.f32 %v167, %v251
    %v253 = vpop.f32.mrb[0].mxu0
    %v254 = vpop.f32.mrb[0].mxu0
    %v255 = vadd.f32 %v167, %v254
    %v256 = vpop.f32.mrb[0].mxu0
    %257 = vdwg.mxu0
    %v258 = vmax.f32 %v252, 0.0
    %v259 = vmax.f32 %v255, 0.0
    %v260 = vpack.c.bf16 %v259, %v258
    %v261 = vld [vmem:[#allocation4] sm:$0xf]
    %v262 = vld [vmem:[#allocation4 + $0x4] sm:$0xf]
    %v263 = vld [vmem:[#allocation4 + $0x8] sm:$0xf]
    %v264 = vld [vmem:[#allocation4 + $0xc] sm:$0xf]
    %v265 = vld [vmem:[#allocation4 + $0x10] sm:$0xf]
    %v266 = vld [vmem:[#allocation4 + $0x14] sm:$0xf]
    %v267 = vld [vmem:[#allocation4 + $0x18] sm:$0xf]
    %v268 = vld [vmem:[#allocation4 + $0x1c] sm:$0xf]
    %v269 = vld [vmem:[#allocation4 + $0x20] sm:$0xf]
    %v270 = vld [vmem:[#allocation4 + $0x24] sm:$0xf]
    %v271 = vld [vmem:[#allocation4 + $0x28] sm:$0xf]
    %v272 = vld [vmem:[#allocation4 + $0x2c] sm:$0xf]
    %v273 = vld [vmem:[#allocation4 + $0x30] sm:$0xf]
    %v274 = vld [vmem:[#allocation4 + $0x34] sm:$0xf]
    %v275 = vld [vmem:[#allocation4 + $0x38] sm:$0xf]
    %v276 = vld [vmem:[#allocation4 + $0x3c] sm:$0xf]
    %v277 = vld [vmem:[%s6] sm:$0x1]
    %v279 = vlaneseq
    %v280 = vshrl.u32 %v279, 7
    %v281 = vsub.s32 0, %v280
    %v282 = vrot.slane %v277, %v281
    %v300 = vunpack.c.l.b16 %v261
    %v301 = vunpack.c.l.b16 %v262
    %v302 = vunpack.c.l.b16 %v263
    %v303 = vunpack.c.l.b16 %v264
    %v304 = vunpack.c.l.b16 %v265
    %v305 = vunpack.c.l.b16 %v266
    %v306 = vunpack.c.l.b16 %v267
    %v307 = vunpack.c.l.b16 %v268
    %v308 = vunpack.c.l.b16 %v269
    %v309 = vunpack.c.l.b16 %v270
    %v310 = vunpack.c.l.b16 %v271
    %v311 = vunpack.c.l.b16 %v272
    %v312 = vunpack.c.l.b16 %v273
    %v313 = vunpack.c.l.b16 %v274
    %v314 = vunpack.c.l.b16 %v275
    %v315 = vunpack.c.l.b16 %v276
    %v316 = vpack.c.b16 %v301, %v300
    %v317 = vpack.c.b16 %v303, %v302
    %v318 = vpack.c.b16 %v305, %v304
    %v319 = vpack.c.b16 %v307, %v306
    %v320 = vpack.c.b16 %v309, %v308
    %v321 = vpack.c.b16 %v311, %v310
    %v322 = vpack.c.b16 %v313, %v312
    %v323 = vpack.c.b16 %v315, %v314
    %332 = vmatprep.subr.bf16.mxu0 0
    %333 = vmatpush1.bf16.msra.mxu0 %v316
    %334 = vmatprep.subr.bf16.mxu0 0
    %335 = vmatpush1.bf16.msra.mxu0 %v317
    %336 = vmatprep.subr.bf16.mxu0 0
    %337 = vmatpush1.bf16.msra.mxu0 %v318
    %338 = vmatprep.subr.bf16.mxu0 0
    %339 = vmatpush1.bf16.msra.mxu0 %v319
    %340 = vmatprep.subr.bf16.mxu0 0
    %341 = vmatpush1.bf16.msra.mxu0 %v320
    %342 = vmatprep.subr.bf16.mxu0 0
    %343 = vmatpush1.bf16.msra.mxu0 %v321
    %344 = vmatprep.subr.bf16.mxu0 0
    %345 = vmatpush1.bf16.msra.mxu0 %v322
    %346 = vmatprep.subr.bf16.mxu0 0
    %347 = vmatpush1.bf16.msra.mxu0 %v323
    %348 = vmatprep.subr.bf16.mxu0 0
    %349 = vmatpush1.bf16.msra.mxu0 0
    %350 = vmatprep.subr.bf16.mxu0 0
    %351 = vmatpush1.bf16.msra.mxu0 0
    %352 = vmatprep.subr.bf16.mxu0 0
    %353 = vmatpush1.bf16.msra.mxu0 0
    %354 = vmatprep.subr.bf16.mxu0 0
    %355 = vmatpush1.bf16.msra.mxu0 0
    %356 = vmatprep.subr.bf16.mxu0 0
    %357 = vmatpush1.bf16.msra.mxu0 0
    %358 = vmatprep.subr.bf16.mxu0 0
    %359 = vmatpush1.bf16.msra.mxu0 0
    %360 = vmatprep.subr.bf16.mxu0 0
    %361 = vmatpush1.bf16.msra.mxu0 0
    %362 = vmatprep.subr.bf16.mxu0 0
    %363 = vmatpush1.bf16.msra.mxu0 0
    %364 = vmatprep.mubr.bf16.mxu0 0
    %365 = vmatmul.mubr.bf16.gmra.mrb[0].mxu0 %v260
    %v366 = vpop.f32.mrb[0].mxu0
    %v367 = vadd.f32 %v282, %v366
    %v368 = vpop.f32.mrb[0].mxu0
    %v369 = vpop.f32.mrb[0].mxu0
    %v370 = vadd.f32 %v282, %v369
    %v371 = vpop.f32.mrb[0].mxu0
    %372 = vdwg.mxu0
    %v373 = vmax.f32 %v367, 0.0
    %v374 = vmax.f32 %v370, 0.0
    %v375 = vpack.c.bf16 %v374, %v373
    %v376 = vld [vmem:[#allocation6] sm:$0xf]
    %v377 = vld [vmem:[#allocation6 + $0x4] sm:$0xf]
    %v378 = vld [vmem:[#allocation6 + $0x8] sm:$0xf]
    %v379 = vld [vmem:[#allocation6 + $0xc] sm:$0xf]
    %v380 = vld [vmem:[#allocation6 + $0x10] sm:$0xf]
    %v381 = vld [vmem:[#allocation6 + $0x14] sm:$0xf]
    %v382 = vld [vmem:[#allocation6 + $0x18] sm:$0xf]
    %v383 = vld [vmem:[#allocation6 + $0x1c] sm:$0xf]
    %v384 = vld [vmem:[#allocation6 + $0x20] sm:$0xf]
    %v385 = vld [vmem:[#allocation6 + $0x24] sm:$0xf]
    %v386 = vld [vmem:[#allocation6 + $0x28] sm:$0xf]
    %v387 = vld [vmem:[#allocation6 + $0x2c] sm:$0xf]
    %v388 = vld [vmem:[#allocation6 + $0x30] sm:$0xf]
    %v389 = vld [vmem:[#allocation6 + $0x34] sm:$0xf]
    %v390 = vld [vmem:[#allocation6 + $0x38] sm:$0xf]
    %v391 = vld [vmem:[#allocation6 + $0x3c] sm:$0xf]
    %v392 = vld [vmem:[%s8] sm:$0x1]
    %v394 = vlaneseq
    %v395 = vshrl.u32 %v394, 7
    %v396 = vsub.s32 0, %v395
    %v397 = vrot.slane %v392, %v396
    %v415 = vunpack.c.l.b16 %v376
    %v416 = vunpack.c.l.b16 %v377
    %v417 = vunpack.c.l.b16 %v378
    %v418 = vunpack.c.l.b16 %v379
    %v419 = vunpack.c.l.b16 %v380
    %v420 = vunpack.c.l.b16 %v381
    %v421 = vunpack.c.l.b16 %v382
    %v422 = vunpack.c.l.b16 %v383
    %v423 = vunpack.c.l.b16 %v384
    %v424 = vunpack.c.l.b16 %v385
    %v425 = vunpack.c.l.b16 %v386
    %v426 = vunpack.c.l.b16 %v387
    %v427 = vunpack.c.l.b16 %v388
    %v428 = vunpack.c.l.b16 %v389
    %v429 = vunpack.c.l.b16 %v390
    %v430 = vunpack.c.l.b16 %v391
    %v431 = vpack.c.b16 %v416, %v415
    %v432 = vpack.c.b16 %v418, %v417
    %v433 = vpack.c.b16 %v420, %v419
    %v434 = vpack.c.b16 %v422, %v421
    %v435 = vpack.c.b16 %v424, %v423
    %v436 = vpack.c.b16 %v426, %v425
    %v437 = vpack.c.b16 %v428, %v427
    %v438 = vpack.c.b16 %v430, %v429
    %447 = vmatprep.subr.bf16.mxu0 0
    %448 = vmatpush1.bf16.msra.mxu0 %v431
    %449 = vmatprep.subr.bf16.mxu0 0
    %450 = vmatpush1.bf16.msra.mxu0 %v432
    %451 = vmatprep.subr.bf16.mxu0 0
    %452 = vmatpush1.bf16.msra.mxu0 %v433
    %453 = vmatprep.subr.bf16.mxu0 0
    %454 = vmatpush1.bf16.msra.mxu0 %v434
    %455 = vmatprep.subr.bf16.mxu0 0
    %456 = vmatpush1.bf16.msra.mxu0 %v435
    %457 = vmatprep.subr.bf16.mxu0 0
    %458 = vmatpush1.bf16.msra.mxu0 %v436
    %459 = vmatprep.subr.bf16.mxu0 0
    %460 = vmatpush1.bf16.msra.mxu0 %v437
    %461 = vmatprep.subr.bf16.mxu0 0
    %462 = vmatpush1.bf16.msra.mxu0 %v438
    %463 = vmatprep.subr.bf16.mxu0 0
    %464 = vmatpush1.bf16.msra.mxu0 0
    %465 = vmatprep.subr.bf16.mxu0 0
    %466 = vmatpush1.bf16.msra.mxu0 0
    %467 = vmatprep.subr.bf16.mxu0 0
    %468 = vmatpush1.bf16.msra.mxu0 0
    %469 = vmatprep.subr.bf16.mxu0 0
    %470 = vmatpush1.bf16.msra.mxu0 0
    %471 = vmatprep.subr.bf16.mxu0 0
    %472 = vmatpush1.bf16.msra.mxu0 0
    %473 = vmatprep.subr.bf16.mxu0 0
    %474 = vmatpush1.bf16.msra.mxu0 0
    %475 = vmatprep.subr.bf16.mxu0 0
    %476 = vmatpush1.bf16.msra.mxu0 0
    %477 = vmatprep.subr.bf16.mxu0 0
    %478 = vmatpush1.bf16.msra.mxu0 0
    %479 = vmatprep.mubr.bf16.mxu0 0
    %480 = vmatmul.mubr.bf16.gmra.mrb[0].mxu0 %v375
    %v481 = vpop.f32.mrb[0].mxu0
    %v482 = vadd.f32 %v397, %v481
    %v483 = vpop.f32.mrb[0].mxu0
    %v484 = vpop.f32.mrb[0].mxu0
    %v485 = vadd.f32 %v397, %v484
    %v486 = vpop.f32.mrb[0].mxu0
    %487 = vdwg.mxu0
    %v488 = vmax.f32 %v482, 0.0
    %v489 = vmax.f32 %v485, 0.0
    %v490 = vpack.c.bf16 %v489, %v488
    %v491 = vld [vmem:[%s9] sm:$0xf]
    %v492 = vld [vmem:[%s9 + $0x4] sm:$0xf]
    %v493 = vld [vmem:[%s9 + $0x8] sm:$0xf]
    %v494 = vld [vmem:[%s9 + $0xc] sm:$0xf]
    %v495 = vld [vmem:[%s9 + $0x10] sm:$0xf]
    %v496 = vld [vmem:[%s9 + $0x14] sm:$0xf]
    %v497 = vld [vmem:[%s9 + $0x18] sm:$0xf]
    %v498 = vld [vmem:[%s9 + $0x1c] sm:$0xf]
    %v499 = vld [vmem:[%s9 + $0x20] sm:$0xf]
    %v500 = vld [vmem:[%s9 + $0x24] sm:$0xf]
    %v501 = vld [vmem:[%s9 + $0x28] sm:$0xf]
    %v502 = vld [vmem:[%s9 + $0x2c] sm:$0xf]
    %v503 = vld [vmem:[%s9 + $0x30] sm:$0xf]
    %v504 = vld [vmem:[%s9 + $0x34] sm:$0xf]
    %v505 = vld [vmem:[%s9 + $0x38] sm:$0xf]
    %v506 = vld [vmem:[%s9 + $0x3c] sm:$0xf]
    %v507 = vld [vmem:[%s10] sm:$0x1]
    %v509 = vlaneseq
    %v510 = vshrl.u32 %v509, 7
    %v511 = vsub.s32 0, %v510
    %v512 = vrot.slane %v507, %v511
    %v530 = vunpack.c.l.b16 %v491
    %v531 = vunpack.c.l.b16 %v492
    %v532 = vunpack.c.l.b16 %v493
    %v533 = vunpack.c.l.b16 %v494
    %v534 = vunpack.c.l.b16 %v495
    %v535 = vunpack.c.l.b16 %v496
    %v536 = vunpack.c.l.b16 %v497
    %v537 = vunpack.c.l.b16 %v498
    %v538 = vunpack.c.l.b16 %v499
    %v539 = vunpack.c.l.b16 %v500
    %v540 = vunpack.c.l.b16 %v501
    %v541 = vunpack.c.l.b16 %v502
    %v542 = vunpack.c.l.b16 %v503
    %v543 = vunpack.c.l.b16 %v504
    %v544 = vunpack.c.l.b16 %v505
    %v545 = vunpack.c.l.b16 %v506
    %v546 = vpack.c.b16 %v531, %v530
    %v547 = vpack.c.b16 %v533, %v532
    %v548 = vpack.c.b16 %v535, %v534
    %v549 = vpack.c.b16 %v537, %v536
    %v550 = vpack.c.b16 %v539, %v538
    %v551 = vpack.c.b16 %v541, %v540
    %v552 = vpack.c.b16 %v543, %v542
    %v553 = vpack.c.b16 %v545, %v544
    %562 = vmatprep.subr.bf16.mxu0 0
    %563 = vmatpush1.bf16.msra.mxu0 %v546
    %564 = vmatprep.subr.bf16.mxu0 0
    %565 = vmatpush1.bf16.msra.mxu0 %v547
    %566 = vmatprep.subr.bf16.mxu0 0
    %567 = vmatpush1.bf16.msra.mxu0 %v548
    %568 = vmatprep.subr.bf16.mxu0 0
    %569 = vmatpush1.bf16.msra.mxu0 %v549
    %570 = vmatprep.subr.bf16.mxu0 0
    %571 = vmatpush1.bf16.msra.mxu0 %v550
    %572 = vmatprep.subr.bf16.mxu0 0
    %573 = vmatpush1.bf16.msra.mxu0 %v551
    %574 = vmatprep.subr.bf16.mxu0 0
    %575 = vmatpush1.bf16.msra.mxu0 %v552
    %576 = vmatprep.subr.bf16.mxu0 0
    %577 = vmatpush1.bf16.msra.mxu0 %v553
    %578 = vmatprep.subr.bf16.mxu0 0
    %579 = vmatpush1.bf16.msra.mxu0 0
    %580 = vmatprep.subr.bf16.mxu0 0
    %581 = vmatpush1.bf16.msra.mxu0 0
    %582 = vmatprep.subr.bf16.mxu0 0
    %583 = vmatpush1.bf16.msra.mxu0 0
    %584 = vmatprep.subr.bf16.mxu0 0
    %585 = vmatpush1.bf16.msra.mxu0 0
    %586 = vmatprep.subr.bf16.mxu0 0
    %587 = vmatpush1.bf16.msra.mxu0 0
    %588 = vmatprep.subr.bf16.mxu0 0
    %589 = vmatpush1.bf16.msra.mxu0 0
    %590 = vmatprep.subr.bf16.mxu0 0
    %591 = vmatpush1.bf16.msra.mxu0 0
    %592 = vmatprep.subr.bf16.mxu0 0
    %593 = vmatpush1.bf16.msra.mxu0 0
    %594 = vmatprep.mubr.bf16.mxu0 0
    %595 = vmatmul.mubr.bf16.gmra.mrb[0].mxu0 %v490
    %v596 = vpop.f32.mrb[0].mxu0
    %v597 = vadd.f32 %v512, %v596
    %v598 = vpop.f32.mrb[0].mxu0
    %v599 = vpop.f32.mrb[0].mxu0
    %v600 = vadd.f32 %v512, %v599
    %v601 = vpop.f32.mrb[0].mxu0
    %602 = vdwg.mxu0
    %vm603 = vcmask 64512
    %604 = vst.msk [vmem:[%s11] sm:$0xff] %vm603, %v597
    %605 = vst.msk [vmem:[%s11 + $0x8] sm:$0xff] %vm603, %v600
    // Predicated region
    $region58: #{tpu_custom_call.1} parent=1 // pred_check
      _
    $region59: #{tpu_custom_call.1} parent=1 // pred_check_branch
      %607 = sbr.rel (0) target = $region61
    $region60: #{tpu_custom_call.1} parent=1 // pred_region
      _
    $region61: #{tpu_custom_call.1} parent=1 // pred_fallthru
      _
    // Predicated region
    $region62: #{tpu_custom_call.1} parent=1 // pred_check
      _
    $region63: #{tpu_custom_call.1} parent=1 // pred_check_branch
      %609 = sbr.rel (0) target = $region65
    $region64: #{tpu_custom_call.1} parent=1 // pred_region
      _
    $region65: #{tpu_custom_call.1} parent=1 // pred_fallthru
      _
    %610 = vsyncpa [#allocation3], 1
    %611 = vsyncpa [#allocation5], 1

</llo_original>
